<compile_context>
chip_gen: v6e
topology: v6e:2x2x1
jax: 0.10.0
libtpu: 0.0.40
codegen_flags: <defaults>
</compile_context>

<pallas_src>
import math

import jax
import jax.numpy as jnp
from jax.experimental import pallas as pl
from jax.experimental.pallas import tpu as pltpu


def _event_time_kernel(t_ref, sel_ref, div_ref, off_ref, o_ref):
    # t_ref:   (Nb, T)     event times for this block of batch rows
    # sel_ref: (T, T*dim)  0/1 selector: (t @ sel)[n, t*dim + d] == t[n, t]
    # div_ref: (1, T*dim)  div_tiled[t*dim + d] == div_term[d // 2]
    # off_ref: (1, T*dim)  off_tiled[t*dim + d] == (d % 2) * pi/2
    # o_ref:   (Nb, T*dim) flattened (T, dim) positional encoding per row
    t = t_ref[...].astype(jnp.float32)                       # compute in f32 always
    # Lane expansion on the (otherwise idle) MXU. HIGHEST precision keeps the full
    # f32 mantissa of the time values (selector entries are exactly 0.0 / 1.0).
    t_exp = jax.lax.dot_general(
        t, sel_ref[...],
        (((1,), (0,)), ((), ())),
        precision=jax.lax.Precision.HIGHEST,
        preferred_element_type=jnp.float32,
    )                                                        # (Nb, T*dim)
    phase = t_exp * div_ref[...] + off_ref[...]              # VPU mul + add
    o_ref[...] = jnp.sin(phase).astype(o_ref.dtype)          # single EUP sin, cast at store


def _choose_block_rows(n_rows: int, lane_width: int, target_bytes: int = 1 << 20) -> int:
    """Rows per grid block so each output block is ~target_bytes (f32), respecting the
    sublane constraint (multiple of 8, or the full array extent)."""
    rows = max(1, target_bytes // (lane_width * 4))
    if rows >= n_rows:
        # Whole problem fits in one block; if it is big enough, still hand the
        # megacore (v7x: 2 TCs) at least two blocks.
        if n_rows >= 16:
            return max(8, (n_rows // 2 // 8) * 8)
        return n_rows
    return max(8, (rows // 8) * 8)


def event_time_encoding(event_times: jax.Array, dim: int) -> jax.Array:
    """Pallas TPU implementation of EventTimeEncoding.forward.

    event_times: (N, T) float array.
    returns:     (N, T, dim) array (same dtype as event_times) where
                 out[..., 0::2] = sin(t * div_term), out[..., 1::2] = cos(t * div_term).
    """
    assert dim % 2 == 0, "dim must be even (same constraint as the PyTorch module)"
    N, T = event_times.shape
    dtype = event_times.dtype
    L = T * dim  # lane width of the flattened output

    # Deterministic "buffer" setup, identical to the PyTorch __init__ (kept in f32).
    div_term = jnp.exp(
        jnp.arange(0, dim, 2, dtype=jnp.float32) * (-math.log(10000.0) / dim)
    )                                                            # (dim//2,)
    div_full = jnp.repeat(div_term, 2)                           # div_full[d] = div_term[d//2]
    off_full = jnp.tile(jnp.array([0.0, math.pi / 2.0], jnp.float32), dim // 2)
    div_tiled = jnp.tile(div_full, T).reshape(1, L)              # (1, T*dim) f32
    off_tiled = jnp.tile(off_full, T).reshape(1, L)              # (1, T*dim) f32

    # 0/1 selector that repeats each time value `dim` times along lanes via the MXU.
    col_owner = jnp.arange(L, dtype=jnp.int32) // dim            # (L,)
    sel = (col_owner[None, :] == jnp.arange(T, dtype=jnp.int32)[:, None]).astype(jnp.float32)

    nb = _choose_block_rows(N, L)
    grid = (pl.cdiv(N, nb),)

    cost = pl.CostEstimate(
        flops=2 * N * T * L + 2 * N * L,
        transcendentals=N * L,
        bytes_accessed=(N * T * event_times.dtype.itemsize
                        + N * L * jnp.dtype(dtype).itemsize
                        + (T * L + 2 * L) * 4),
    )

    out_flat = pl.pallas_call(
        _event_time_kernel,
        out_shape=jax.ShapeDtypeStruct((N, L), dtype),
        grid_spec=pltpu.PrefetchScalarGridSpec(
            num_scalar_prefetch=0,
            grid=grid,
            in_specs=[
                pl.BlockSpec((nb, T), lambda i: (i, 0)),   # event times block
                pl.BlockSpec((T, L), lambda i: (0, 0)),    # selector (resident constant)
                pl.BlockSpec((1, L), lambda i: (0, 0)),    # div_tiled (resident constant)
                pl.BlockSpec((1, L), lambda i: (0, 0)),    # offset    (resident constant)
            ],
            out_specs=pl.BlockSpec((nb, L), lambda i: (i, 0)),
        ),
        compiler_params=pltpu.CompilerParams(
            dimension_semantics=("parallel",),
        ),
        cost_estimate=cost,
    )(event_times, sel, div_tiled, off_tiled)

    return out_flat.reshape(N, T, dim)


def _reference(event_times: jax.Array, dim: int) -> jax.Array:
    """Pure-JAX reference mirroring the PyTorch forward."""
    N, T = event_times.shape
    div_term = jnp.exp(
        jnp.arange(0, dim, 2, dtype=jnp.float32) * (-math.log(10000.0) / dim)
    )
    phase = event_times.astype(jnp.float32)[..., None] * div_term  # (N, T, dim // 2)
    pe = jnp.zeros((N, T, dim), dtype=event_times.dtype)
    pe = pe.at[..., 0::2].set(jnp.sin(phase).astype(event_times.dtype))
    pe = pe.at[..., 1::2].set(jnp.cos(phase).astype(event_times.dtype))
    return pe


if __name__ == "__main__":
    # Small shapes consistent with the module: batch N=2, sequence T=8, dim=32.
    N, T, DIM = 2, 8, 32
    key = jax.random.PRNGKey(0)
    event_times = jax.random.uniform(
        key, (N, T), dtype=jnp.float32, minval=0.0, maxval=100.0
    )

    out = jax.block_until_ready(event_time_encoding(event_times, DIM))
    ref = _reference(event_times, DIM)

    assert out.shape == (N, T, DIM)
    assert out.dtype == event_times.dtype
    max_err = float(jnp.max(jnp.abs(out.astype(jnp.float32) - ref.astype(jnp.float32))))
    # Odd lanes use sin(x + pi/2) instead of cos(x); difference is a few f32 ulps.
    assert max_err < 2e-5, f"mismatch vs reference: max abs err {max_err}"

    print("KERNEL_OK")
</pallas_src>

<mosaic_0001>
module attributes {stable_mosaic.version = 11 : i64} {
  func.func @_event_time_kernel(%arg0: i32, %arg1: memref<2x8xf32, #tpu.memory_space<vmem>>, %arg2: memref<8x256xf32, #tpu.memory_space<vmem>>, %arg3: memref<1x256xf32, #tpu.memory_space<vmem>>, %arg4: memref<1x256xf32, #tpu.memory_space<vmem>>, %arg5: memref<2x256xf32, #tpu.memory_space<vmem>>) attributes {dimension_semantics = [#tpu.dimension_semantics<parallel>], iteration_bounds = array<i64: 1>, scalar_prefetch = 0 : i64, scratch_operands = 0 : i64, tpu.core_type = #tpu.core_type<tc>, window_params = [{transform_indices = @transform_0, window_bounds = array<i64: 2, 8>}, {pipeline_mode = #tpu.pipeline_mode<synchronous>, transform_indices = @transform_1, window_bounds = array<i64: 8, 256>}, {pipeline_mode = #tpu.pipeline_mode<synchronous>, transform_indices = @transform_2, window_bounds = array<i64: 1, 256>}, {pipeline_mode = #tpu.pipeline_mode<synchronous>, transform_indices = @transform_3, window_bounds = array<i64: 1, 256>}, {transform_indices = @transform_4, window_bounds = array<i64: 2, 256>}]} {
    %c0 = arith.constant 0 : index
    %c0_0 = arith.constant 0 : index
    %0 = vector.load %arg1[%c0, %c0_0] : memref<2x8xf32, #tpu.memory_space<vmem>>, vector<2x8xf32>
    %c0_1 = arith.constant 0 : index
    %c0_2 = arith.constant 0 : index
    %1 = vector.load %arg2[%c0_1, %c0_2] : memref<8x256xf32, #tpu.memory_space<vmem>>, vector<8x256xf32>
    %cst = arith.constant dense<0.000000e+00> : vector<2x256xf32>
    %2 = tpu.matmul %0, %1, %cst {dimension_numbers = #tpu.dot_dimension_numbers<[1], [0], [0], [1], [0, 0, 1, 1], [], []>, precision = #tpu.contract_precision<fp32>} : vector<2x8xf32>, vector<8x256xf32>, vector<2x256xf32> -> vector<2x256xf32>
    %c0_3 = arith.constant 0 : index
    %c0_4 = arith.constant 0 : index
    %3 = vector.load %arg3[%c0_3, %c0_4] : memref<1x256xf32, #tpu.memory_space<vmem>>, vector<1x256xf32>
    %4 = vector.broadcast %3 : vector<1x256xf32> to vector<2x256xf32>
    %5 = arith.mulf %2, %4 : vector<2x256xf32>
    %c0_5 = arith.constant 0 : index
    %c0_6 = arith.constant 0 : index
    %6 = vector.load %arg4[%c0_5, %c0_6] : memref<1x256xf32, #tpu.memory_space<vmem>>, vector<1x256xf32>
    %7 = vector.broadcast %6 : vector<1x256xf32> to vector<2x256xf32>
    %8 = arith.addf %5, %7 : vector<2x256xf32>
    %9 = math.sin %8 : vector<2x256xf32>
    %c0_7 = arith.constant 0 : index
    %c0_8 = arith.constant 0 : index
    %10 = vector.load %arg5[%c0_7, %c0_8] : memref<2x256xf32, #tpu.memory_space<vmem>>, vector<2x256xf32>
    tpu.vector_store %arg5[%c0_7, %c0_8], %9 {strides = array<i32>} : memref<2x256xf32, #tpu.memory_space<vmem>>, vector<2x256xf32>,
    return
  }
  func.func @transform_0(%arg0: i32) -> (i32, i32) {
    %c0_i32 = arith.constant 0 : i32
    %c0_i32_0 = arith.constant 0 : i32
    return %arg0, %c0_i32 : i32, i32
  }
  func.func @transform_1(%arg0: i32) -> (i32, i32) {
    %c0_i32 = arith.constant 0 : i32
    %c0_i32_0 = arith.constant 0 : i32
    %c0_i32_1 = arith.constant 0 : i32
    return %c0_i32, %c0_i32_0 : i32, i32
  }
  func.func @transform_2(%arg0: i32) -> (i32, i32) {
    %c0_i32 = arith.constant 0 : i32
    %c0_i32_0 = arith.constant 0 : i32
    %c0_i32_1 = arith.constant 0 : i32
    return %c0_i32, %c0_i32_0 : i32, i32
  }
  func.func @transform_3(%arg0: i32) -> (i32, i32) {
    %c0_i32 = arith.constant 0 : i32
    %c0_i32_0 = arith.constant 0 : i32
    %c0_i32_1 = arith.constant 0 : i32
    return %c0_i32, %c0_i32_0 : i32, i32
  }
  func.func @transform_4(%arg0: i32) -> (i32, i32) {
    %c0_i32 = arith.constant 0 : i32
    %c0_i32_0 = arith.constant 0 : i32
    return %arg0, %c0_i32 : i32, i32
  }
}

</mosaic_0001>

<llo_original>
// kernel: tpu_custom_call.1
$region0: #{tpu_custom_call.1}
  #allocation0 [shape = 'u32[]', space=smem, size = 0x4, offset = 0x4, fixed_abs, tag = 'smem constant byte address 0x4 - core index']
  #allocation1 [shape = 'u32[144,128]{1,0:T(1,128)}', space=vmem, size = 0x12000, scoped, tag = 'internal scratch']
  %s0 = inlined_call_operand.hbm [shape: f32[2,8], index: 0, kind: input, shape index: {}]
  %s1 = inlined_call_operand.hbm [shape: f32[8,256], index: 1, kind: input, shape index: {}]
  %s2 = inlined_call_operand.vmem [shape: f32[1,256], index: 2, kind: input, shape index: {}]
  %s3 = inlined_call_operand.vmem [shape: f32[1,256], index: 3, kind: input, shape index: {}]
  %s4 = inlined_call_operand.hbm [shape: f32[2,256], index: 4, kind: output, shape index: {}]
  %s5 = sld [smem:[#allocation0]]
  $region34: #{tpu_custom_call.1} parent=0
    _
  %s7 = ssub.s32 1, %s5
  %s8 = scalar_select 0, %s7, %s5
  $region1: #{tpu_custom_call.1} parent=0
    #allocation2 [shape = 'u8[1024]{0}', space=vmem, size = 0x400, scoped, tag = 'input window, operand 0, single buffered']
    #allocation3 [shape = 's32[1]{0}', space=sflag, size = 0x4, scoped, tag = 'scoped memory for tpu_custom_call.1']
    #allocation4 [shape = 's32[1]{0}', space=sflag, size = 0x4, scoped, tag = 'scoped memory for tpu_custom_call.1']
    #allocation5 [shape = 'u8[8192]{0}', space=vmem, size = 0x2000, scoped, tag = 'input window, operand 1, single buffered']
    #allocation6 [shape = 's32[1]{0}', space=sflag, size = 0x4, scoped, tag = 'scoped memory for tpu_custom_call.1']
    #allocation7 [shape = 'u8[2048]{0}', space=vmem, size = 0x800, scoped, tag = 'output window, operand 0, single buffered']
    %9 = vsyncpa [#allocation3], 0
    %10 = vsyncpa [#allocation6], 0
    %11 = vsyncpa [#allocation4], 0
    // Predicated region
    $region2: #{tpu_custom_call.1} parent=1 // pred_check
      _
    $region3: #{tpu_custom_call.1} parent=1 // pred_check_branch
      %13 = sbr.rel (0) target = $region5
    $region4: #{tpu_custom_call.1} parent=1 // pred_region
      %s15 = ssub.s32 32, 32
      %16 = vsyncadd [#allocation3], %s15
      %s18 = sshll.u32 [#allocation2], 4
      %s19 = int_to_ptr.vmem [resolvable:$true] %s18
      %21 = dma.hbm_to_vmem [thread:$0]  %s0, 32, %s19, [#allocation3]
    $region5: #{tpu_custom_call.1} parent=1 // pred_fallthru
      _
    // Predicated region
    $region6: #{tpu_custom_call.1} parent=1 // pred_check
      _
    $region7: #{tpu_custom_call.1} parent=1 // pred_check_branch
      %23 = sbr.rel (0) target = $region9
    $region8: #{tpu_custom_call.1} parent=1 // pred_region
      %s25 = ssub.s32 256, 256
      %26 = vsyncadd [#allocation6], %s25
      %s28 = sshll.u32 [#allocation5], 4
      %s29 = int_to_ptr.vmem [resolvable:$true] %s28
      %31 = dma.hbm_to_vmem [thread:$0]  %s1, 256, %s29, [#allocation6]
    $region9: #{tpu_custom_call.1} parent=1 // pred_fallthru
      _
    // Predicated region
    $region10: #{tpu_custom_call.1} parent=1 // pred_check
      _
    $region11: #{tpu_custom_call.1} parent=1 // pred_check_branch
      %33 = sbr.rel (0) target = $region13
    $region12: #{tpu_custom_call.1} parent=1 // pred_region
      _
    $region13: #{tpu_custom_call.1} parent=1 // pred_fallthru
      _
    // Predicated region
    $region14: #{tpu_custom_call.1} parent=1 // pred_check
      _
    $region15: #{tpu_custom_call.1} parent=1 // pred_check_branch
      %35 = sbr.rel (0) target = $region17
    $region16: #{tpu_custom_call.1} parent=1 // pred_region
      _
    $region17: #{tpu_custom_call.1} parent=1 // pred_fallthru
      _
    // Predicated region
    $region18: #{tpu_custom_call.1} parent=1 // pred_check
      _
    $region19: #{tpu_custom_call.1} parent=1 // pred_check_branch
      %37 = sbr.rel (0) target = $region21
    $region20: #{tpu_custom_call.1} parent=1 // pred_region
      %38 = dma.done [#allocation3], 32
    $region21: #{tpu_custom_call.1} parent=1 // pred_fallthru
      _
    // Predicated region
    $region22: #{tpu_custom_call.1} parent=1 // pred_check
      _
    $region23: #{tpu_custom_call.1} parent=1 // pred_check_branch
      %40 = sbr.rel (0) target = $region25
    $region24: #{tpu_custom_call.1} parent=1 // pred_region
      %41 = dma.done [#allocation6], 256
    $region25: #{tpu_custom_call.1} parent=1 // pred_fallthru
      _
    %v42 = vld [vmem:[#allocation2] sm:$0x3]
    %v43 = vld [vmem:[#allocation5] sm:$0xff]
    %v44 = vld [vmem:[#allocation5 + $0x8] sm:$0xff]
    %vm45 = vcmask 64512
    %v47 = vsel %vm45, %v42, 0
    %49 = vmatprep.subr.mxu0 0.0
    %50 = vmatpush1.msra.mxu0 0.0
    %51 = vmatprep.subr.mxu0 0.0
    %52 = vmatpush1.msra.mxu0 0.0
    %53 = vmatprep.subr.mxu0 0.0
    %54 = vmatpush1.msra.mxu0 0.0
    %55 = vmatprep.subr.mxu0 0.0
    %56 = vmatpush1.msra.mxu0 0.0
    %57 = vmatprep.subr.mxu0 0.0
    %58 = vmatpush1.msra.mxu0 0.0
    %59 = vmatprep.subr.mxu0 0.0
    %60 = vmatpush1.msra.mxu0 0.0
    %61 = vmatprep.subr.mxu0 0.0
    %62 = vmatpush1.msra.mxu0 0.0
    %63 = vmatprep.subr.mxu0 0.0
    %64 = vmatpush1.msra.mxu0 0.0
    %65 = vmatprep.subr.mxu0 0.0
    %66 = vmatpush1.msra.mxu0 0.0
    %67 = vmatprep.subr.mxu0 0.0
    %68 = vmatpush1.msra.mxu0 0.0
    %69 = vmatprep.subr.mxu0 0.0
    %70 = vmatpush1.msra.mxu0 0.0
    %71 = vmatprep.subr.mxu0 0.0
    %72 = vmatpush1.msra.mxu0 0.0
    %73 = vmatprep.subr.mxu0 0.0
    %74 = vmatpush1.msra.mxu0 0.0
    %75 = vmatprep.subr.mxu0 0.0
    %76 = vmatpush1.msra.mxu0 0.0
    %77 = vmatprep.subr.mxu0 0.0
    %78 = vmatpush1.msra.mxu0 0.0
    %v79 = vand.u32 %v44, 4294901760
    %80 = vmatprep.subr.mxu0 %v79
    %v81 = vand.u32 %v43, 4294901760
    %82 = vmatpush1.msra.mxu0 %v81
    %83 = vmatprep.subr.mxu0 0.0
    %84 = vmatpush2.msra.mxu0 0.0
    %85 = vmatprep.subr.mxu0 0.0
    %86 = vmatpush2.msra.mxu0 0.0
    %87 = vmatprep.subr.mxu0 0.0
    %88 = vmatpush2.msra.mxu0 0.0
    %89 = vmatprep.subr.mxu0 0.0
    %90 = vmatpush2.msra.mxu0 0.0
    %91 = vmatprep.subr.mxu0 0.0
    %92 = vmatpush2.msra.mxu0 0.0
    %93 = vmatprep.subr.mxu0 0.0
    %94 = vmatpush2.msra.mxu0 0.0
    %95 = vmatprep.subr.mxu0 0.0
    %96 = vmatpush2.msra.mxu0 0.0
    %97 = vmatprep.subr.mxu0 0.0
    %98 = vmatpush2.msra.mxu0 0.0
    %99 = vmatprep.subr.mxu0 0.0
    %100 = vmatpush2.msra.mxu0 0.0
    %101 = vmatprep.subr.mxu0 0.0
    %102 = vmatpush2.msra.mxu0 0.0
    %103 = vmatprep.subr.mxu0 0.0
    %104 = vmatpush2.msra.mxu0 0.0
    %105 = vmatprep.subr.mxu0 0.0
    %106 = vmatpush2.msra.mxu0 0.0
    %107 = vmatprep.subr.mxu0 0.0
    %108 = vmatpush2.msra.mxu0 0.0
    %109 = vmatprep.subr.mxu0 0.0
    %110 = vmatpush2.msra.mxu0 0.0
    %111 = vmatprep.subr.mxu0 0.0
    %112 = vmatpush2.msra.mxu0 0.0
    %113 = vmatprep.subr.mxu0 0.0
    %114 = vmatpush2.msra.mxu0 0.0
    %115 = vmatprep.mubr.f32.mxu0 0.0
    %v116 = vand.u32 %v47, 4294901760
    %v117 = vsub.f32 %v47, %v116
    %v118 = vand.u32 %v117, 4294901760
    %v119 = vsub.f32 %v117, %v118
    %v120 = vand.u32 %v119, 4294901760
    %121 = vmatmul.mubr.f32.gmra.mxu0 %v120
    %v122 = vpop.f32.mrf.mxu0
    %v123 = vadd.f32 0.0, %v122
    %v124 = vpop.f32.mrf.mxu0
    %v125 = vadd.f32 0.0, %v124
    %126 = vdwg.mxu0
    %127 = vmatprep.subr.mxu0 0.0
    %128 = vmatpush1.msra.mxu0 0.0
    %129 = vmatprep.subr.mxu0 0.0
    %130 = vmatpush1.msra.mxu0 0.0
    %131 = vmatprep.subr.mxu0 0.0
    %132 = vmatpush1.msra.mxu0 0.0
    %133 = vmatprep.subr.mxu0 0.0
    %134 = vmatpush1.msra.mxu0 0.0
    %135 = vmatprep.subr.mxu0 0.0
    %136 = vmatpush1.msra.mxu0 0.0
    %137 = vmatprep.subr.mxu0 0.0
    %138 = vmatpush1.msra.mxu0 0.0
    %139 = vmatprep.subr.mxu0 0.0
    %140 = vmatpush1.msra.mxu0 0.0
    %141 = vmatprep.subr.mxu0 0.0
    %142 = vmatpush1.msra.mxu0 0.0
    %143 = vmatprep.subr.mxu0 0.0
    %144 = vmatpush1.msra.mxu0 0.0
    %145 = vmatprep.subr.mxu0 0.0
    %146 = vmatpush1.msra.mxu0 0.0
    %147 = vmatprep.subr.mxu0 0.0
    %148 = vmatpush1.msra.mxu0 0.0
    %149 = vmatprep.subr.mxu0 0.0
    %150 = vmatpush1.msra.mxu0 0.0
    %151 = vmatprep.subr.mxu0 0.0
    %152 = vmatpush1.msra.mxu0 0.0
    %153 = vmatprep.subr.mxu0 0.0
    %154 = vmatpush1.msra.mxu0 0.0
    %155 = vmatprep.subr.mxu0 0.0
    %156 = vmatpush1.msra.mxu0 0.0
    %v157 = vand.u32 %v44, 4294901760
    %v158 = vsub.f32 %v44, %v157
    %v159 = vand.u32 %v158, 4294901760
    %v160 = vsub.f32 %v158, %v159
    %v161 = vand.u32 %v160, 4294901760
    %162 = vmatprep.subr.mxu0 %v161
    %v163 = vand.u32 %v43, 4294901760
    %v164 = vsub.f32 %v43, %v163
    %v165 = vand.u32 %v164, 4294901760
    %v166 = vsub.f32 %v164, %v165
    %v167 = vand.u32 %v166, 4294901760
    %168 = vmatpush1.msra.mxu0 %v167
    %169 = vmatprep.subr.mxu0 0.0
    %170 = vmatpush2.msra.mxu0 0.0
    %171 = vmatprep.subr.mxu0 0.0
    %172 = vmatpush2.msra.mxu0 0.0
    %173 = vmatprep.subr.mxu0 0.0
    %174 = vmatpush2.msra.mxu0 0.0
    %175 = vmatprep.subr.mxu0 0.0
    %176 = vmatpush2.msra.mxu0 0.0
    %177 = vmatprep.subr.mxu0 0.0
    %178 = vmatpush2.msra.mxu0 0.0
    %179 = vmatprep.subr.mxu0 0.0
    %180 = vmatpush2.msra.mxu0 0.0
    %181 = vmatprep.subr.mxu0 0.0
    %182 = vmatpush2.msra.mxu0 0.0
    %183 = vmatprep.subr.mxu0 0.0
    %184 = vmatpush2.msra.mxu0 0.0
    %185 = vmatprep.subr.mxu0 0.0
    %186 = vmatpush2.msra.mxu0 0.0
    %187 = vmatprep.subr.mxu0 0.0
    %188 = vmatpush2.msra.mxu0 0.0
    %189 = vmatprep.subr.mxu0 0.0
    %190 = vmatpush2.msra.mxu0 0.0
    %191 = vmatprep.subr.mxu0 0.0
    %192 = vmatpush2.msra.mxu0 0.0
    %193 = vmatprep.subr.mxu0 0.0
    %194 = vmatpush2.msra.mxu0 0.0
    %195 = vmatprep.subr.mxu0 0.0
    %196 = vmatpush2.msra.mxu0 0.0
    %197 = vmatprep.subr.mxu0 0.0
    %198 = vmatpush2.msra.mxu0 0.0
    %199 = vmatprep.subr.mxu0 0.0
    %200 = vmatpush2.msra.mxu0 0.0
    %201 = vmatprep.mubr.f32.mxu0 0.0
    %v202 = vand.u32 %v47, 4294901760
    %203 = vmatmul.mubr.f32.gmra.mxu0 %v202
    %v204 = vpop.f32.mrf.mxu0
    %v205 = vadd.f32 %v123, %v204
    %v206 = vpop.f32.mrf.mxu0
    %v207 = vadd.f32 %v125, %v206
    %208 = vdwg.mxu0
    %209 = vmatprep.subr.mxu0 0.0
    %210 = vmatpush1.msra.mxu0 0.0
    %211 = vmatprep.subr.mxu0 0.0
    %212 = vmatpush1.msra.mxu0 0.0
    %213 = vmatprep.subr.mxu0 0.0
    %214 = vmatpush1.msra.mxu0 0.0
    %215 = vmatprep.subr.mxu0 0.0
    %216 = vmatpush1.msra.mxu0 0.0
    %217 = vmatprep.subr.mxu0 0.0
    %218 = vmatpush1.msra.mxu0 0.0
    %219 = vmatprep.subr.mxu0 0.0
    %220 = vmatpush1.msra.mxu0 0.0
    %221 = vmatprep.subr.mxu0 0.0
    %222 = vmatpush1.msra.mxu0 0.0
    %223 = vmatprep.subr.mxu0 0.0
    %224 = vmatpush1.msra.mxu0 0.0
    %225 = vmatprep.subr.mxu0 0.0
    %226 = vmatpush1.msra.mxu0 0.0
    %227 = vmatprep.subr.mxu0 0.0
    %228 = vmatpush1.msra.mxu0 0.0
    %229 = vmatprep.subr.mxu0 0.0
    %230 = vmatpush1.msra.mxu0 0.0
    %231 = vmatprep.subr.mxu0 0.0
    %232 = vmatpush1.msra.mxu0 0.0
    %233 = vmatprep.subr.mxu0 0.0
    %234 = vmatpush1.msra.mxu0 0.0
    %235 = vmatprep.subr.mxu0 0.0
    %236 = vmatpush1.msra.mxu0 0.0
    %237 = vmatprep.subr.mxu0 0.0
    %238 = vmatpush1.msra.mxu0 0.0
    %v239 = vand.u32 %v44, 4294901760
    %v240 = vsub.f32 %v44, %v239
    %241 = vmatprep.subr.mxu0 %v240
    %v242 = vand.u32 %v43, 4294901760
    %v243 = vsub.f32 %v43, %v242
    %244 = vmatpush1.msra.mxu0 %v243
    %245 = vmatprep.subr.mxu0 0.0
    %246 = vmatpush2.msra.mxu0 0.0
    %247 = vmatprep.subr.mxu0 0.0
    %248 = vmatpush2.msra.mxu0 0.0
    %249 = vmatprep.subr.mxu0 0.0
    %250 = vmatpush2.msra.mxu0 0.0
    %251 = vmatprep.subr.mxu0 0.0
    %252 = vmatpush2.msra.mxu0 0.0
    %253 = vmatprep.subr.mxu0 0.0
    %254 = vmatpush2.msra.mxu0 0.0
    %255 = vmatprep.subr.mxu0 0.0
    %256 = vmatpush2.msra.mxu0 0.0
    %257 = vmatprep.subr.mxu0 0.0
    %258 = vmatpush2.msra.mxu0 0.0
    %259 = vmatprep.subr.mxu0 0.0
    %260 = vmatpush2.msra.mxu0 0.0
    %261 = vmatprep.subr.mxu0 0.0
    %262 = vmatpush2.msra.mxu0 0.0
    %263 = vmatprep.subr.mxu0 0.0
    %264 = vmatpush2.msra.mxu0 0.0
    %265 = vmatprep.subr.mxu0 0.0
    %266 = vmatpush2.msra.mxu0 0.0
    %267 = vmatprep.subr.mxu0 0.0
    %268 = vmatpush2.msra.mxu0 0.0
    %269 = vmatprep.subr.mxu0 0.0
    %270 = vmatpush2.msra.mxu0 0.0
    %271 = vmatprep.subr.mxu0 0.0
    %272 = vmatpush2.msra.mxu0 0.0
    %273 = vmatprep.subr.mxu0 0.0
    %274 = vmatpush2.msra.mxu0 0.0
    %275 = vmatprep.subr.mxu0 0.0
    %276 = vmatpush2.msra.mxu0 0.0
    %277 = vmatprep.mubr.f32.mxu0 0.0
    %v278 = vand.u32 %v47, 4294901760
    %v279 = vsub.f32 %v47, %v278
    %280 = vmatmul.mubr.f32.gmra.mxu0 %v279
    %v281 = vpop.f32.mrf.mxu0
    %v282 = vadd.f32 %v205, %v281
    %v283 = vpop.f32.mrf.mxu0
    %v284 = vadd.f32 %v207, %v283
    %285 = vdwg.mxu0
    %286 = vmatprep.subr.mxu0 0.0
    %287 = vmatpush1.msra.mxu0 0.0
    %288 = vmatprep.subr.mxu0 0.0
    %289 = vmatpush1.msra.mxu0 0.0
    %290 = vmatprep.subr.mxu0 0.0
    %291 = vmatpush1.msra.mxu0 0.0
    %292 = vmatprep.subr.mxu0 0.0
    %293 = vmatpush1.msra.mxu0 0.0
    %294 = vmatprep.subr.mxu0 0.0
    %295 = vmatpush1.msra.mxu0 0.0
    %296 = vmatprep.subr.mxu0 0.0
    %297 = vmatpush1.msra.mxu0 0.0
    %298 = vmatprep.subr.mxu0 0.0
    %299 = vmatpush1.msra.mxu0 0.0
    %300 = vmatprep.subr.mxu0 0.0
    %301 = vmatpush1.msra.mxu0 0.0
    %302 = vmatprep.subr.mxu0 0.0
    %303 = vmatpush1.msra.mxu0 0.0
    %304 = vmatprep.subr.mxu0 0.0
    %305 = vmatpush1.msra.mxu0 0.0
    %306 = vmatprep.subr.mxu0 0.0
    %307 = vmatpush1.msra.mxu0 0.0
    %308 = vmatprep.subr.mxu0 0.0
    %309 = vmatpush1.msra.mxu0 0.0
    %310 = vmatprep.subr.mxu0 0.0
    %311 = vmatpush1.msra.mxu0 0.0
    %312 = vmatprep.subr.mxu0 0.0
    %313 = vmatpush1.msra.mxu0 0.0
    %314 = vmatprep.subr.mxu0 0.0
    %315 = vmatpush1.msra.mxu0 0.0
    %v316 = vand.u32 %v44, 4294901760
    %317 = vmatprep.subr.mxu0 %v316
    %v318 = vand.u32 %v43, 4294901760
    %319 = vmatpush1.msra.mxu0 %v318
    %320 = vmatprep.subr.mxu0 0.0
    %321 = vmatpush2.msra.mxu0 0.0
    %322 = vmatprep.subr.mxu0 0.0
    %323 = vmatpush2.msra.mxu0 0.0
    %324 = vmatprep.subr.mxu0 0.0
    %325 = vmatpush2.msra.mxu0 0.0
    %326 = vmatprep.subr.mxu0 0.0
    %327 = vmatpush2.msra.mxu0 0.0
    %328 = vmatprep.subr.mxu0 0.0
    %329 = vmatpush2.msra.mxu0 0.0
    %330 = vmatprep.subr.mxu0 0.0
    %331 = vmatpush2.msra.mxu0 0.0
    %332 = vmatprep.subr.mxu0 0.0
    %333 = vmatpush2.msra.mxu0 0.0
    %334 = vmatprep.subr.mxu0 0.0
    %335 = vmatpush2.msra.mxu0 0.0
    %336 = vmatprep.subr.mxu0 0.0
    %337 = vmatpush2.msra.mxu0 0.0
    %338 = vmatprep.subr.mxu0 0.0
    %339 = vmatpush2.msra.mxu0 0.0
    %340 = vmatprep.subr.mxu0 0.0
    %341 = vmatpush2.msra.mxu0 0.0
    %342 = vmatprep.subr.mxu0 0.0
    %343 = vmatpush2.msra.mxu0 0.0
    %344 = vmatprep.subr.mxu0 0.0
    %345 = vmatpush2.msra.mxu0 0.0
    %346 = vmatprep.subr.mxu0 0.0
    %347 = vmatpush2.msra.mxu0 0.0
    %348 = vmatprep.subr.mxu0 0.0
    %349 = vmatpush2.msra.mxu0 0.0
    %350 = vmatprep.subr.mxu0 0.0
    %351 = vmatpush2.msra.mxu0 0.0
    %352 = vmatprep.mubr.f32.mxu0 0.0
    %v353 = vand.u32 %v47, 4294901760
    %v354 = vsub.f32 %v47, %v353
    %v355 = vand.u32 %v354, 4294901760
    %356 = vmatmul.mubr.f32.gmra.mxu0 %v355
    %v357 = vpop.f32.mrf.mxu0
    %v358 = vadd.f32 %v282, %v357
    %v359 = vpop.f32.mrf.mxu0
    %v360 = vadd.f32 %v284, %v359
    %361 = vdwg.mxu0
    %362 = vmatprep.subr.mxu0 0.0
    %363 = vmatpush1.msra.mxu0 0.0
    %364 = vmatprep.subr.mxu0 0.0
    %365 = vmatpush1.msra.mxu0 0.0
    %366 = vmatprep.subr.mxu0 0.0
    %367 = vmatpush1.msra.mxu0 0.0
    %368 = vmatprep.subr.mxu0 0.0
    %369 = vmatpush1.msra.mxu0 0.0
    %370 = vmatprep.subr.mxu0 0.0
    %371 = vmatpush1.msra.mxu0 0.0
    %372 = vmatprep.subr.mxu0 0.0
    %373 = vmatpush1.msra.mxu0 0.0
    %374 = vmatprep.subr.mxu0 0.0
    %375 = vmatpush1.msra.mxu0 0.0
    %376 = vmatprep.subr.mxu0 0.0
    %377 = vmatpush1.msra.mxu0 0.0
    %378 = vmatprep.subr.mxu0 0.0
    %379 = vmatpush1.msra.mxu0 0.0
    %380 = vmatprep.subr.mxu0 0.0
    %381 = vmatpush1.msra.mxu0 0.0
    %382 = vmatprep.subr.mxu0 0.0
    %383 = vmatpush1.msra.mxu0 0.0
    %384 = vmatprep.subr.mxu0 0.0
    %385 = vmatpush1.msra.mxu0 0.0
    %386 = vmatprep.subr.mxu0 0.0
    %387 = vmatpush1.msra.mxu0 0.0
    %388 = vmatprep.subr.mxu0 0.0
    %389 = vmatpush1.msra.mxu0 0.0
    %390 = vmatprep.subr.mxu0 0.0
    %391 = vmatpush1.msra.mxu0 0.0
    %v392 = vand.u32 %v44, 4294901760
    %v393 = vsub.f32 %v44, %v392
    %v394 = vand.u32 %v393, 4294901760
    %395 = vmatprep.subr.mxu0 %v394
    %v396 = vand.u32 %v43, 4294901760
    %v397 = vsub.f32 %v43, %v396
    %v398 = vand.u32 %v397, 4294901760
    %399 = vmatpush1.msra.mxu0 %v398
    %400 = vmatprep.subr.mxu0 0.0
    %401 = vmatpush2.msra.mxu0 0.0
    %402 = vmatprep.subr.mxu0 0.0
    %403 = vmatpush2.msra.mxu0 0.0
    %404 = vmatprep.subr.mxu0 0.0
    %405 = vmatpush2.msra.mxu0 0.0
    %406 = vmatprep.subr.mxu0 0.0
    %407 = vmatpush2.msra.mxu0 0.0
    %408 = vmatprep.subr.mxu0 0.0
    %409 = vmatpush2.msra.mxu0 0.0
    %410 = vmatprep.subr.mxu0 0.0
    %411 = vmatpush2.msra.mxu0 0.0
    %412 = vmatprep.subr.mxu0 0.0
    %413 = vmatpush2.msra.mxu0 0.0
    %414 = vmatprep.subr.mxu0 0.0
    %415 = vmatpush2.msra.mxu0 0.0
    %416 = vmatprep.subr.mxu0 0.0
    %417 = vmatpush2.msra.mxu0 0.0
    %418 = vmatprep.subr.mxu0 0.0
    %419 = vmatpush2.msra.mxu0 0.0
    %420 = vmatprep.subr.mxu0 0.0
    %421 = vmatpush2.msra.mxu0 0.0
    %422 = vmatprep.subr.mxu0 0.0
    %423 = vmatpush2.msra.mxu0 0.0
    %424 = vmatprep.subr.mxu0 0.0
    %425 = vmatpush2.msra.mxu0 0.0
    %426 = vmatprep.subr.mxu0 0.0
    %427 = vmatpush2.msra.mxu0 0.0
    %428 = vmatprep.subr.mxu0 0.0
    %429 = vmatpush2.msra.mxu0 0.0
    %430 = vmatprep.subr.mxu0 0.0
    %431 = vmatpush2.msra.mxu0 0.0
    %432 = vmatprep.mubr.f32.mxu0 0.0
    %v433 = vand.u32 %v47, 4294901760
    %434 = vmatmul.mubr.f32.gmra.mxu0 %v433
    %v435 = vpop.f32.mrf.mxu0
    %v436 = vadd.f32 %v358, %v435
    %v437 = vpop.f32.mrf.mxu0
    %v438 = vadd.f32 %v360, %v437
    %439 = vdwg.mxu0
    %440 = vmatprep.subr.mxu0 0.0
    %441 = vmatpush1.msra.mxu0 0.0
    %442 = vmatprep.subr.mxu0 0.0
    %443 = vmatpush1.msra.mxu0 0.0
    %444 = vmatprep.subr.mxu0 0.0
    %445 = vmatpush1.msra.mxu0 0.0
    %446 = vmatprep.subr.mxu0 0.0
    %447 = vmatpush1.msra.mxu0 0.0
    %448 = vmatprep.subr.mxu0 0.0
    %449 = vmatpush1.msra.mxu0 0.0
    %450 = vmatprep.subr.mxu0 0.0
    %451 = vmatpush1.msra.mxu0 0.0
    %452 = vmatprep.subr.mxu0 0.0
    %453 = vmatpush1.msra.mxu0 0.0
    %454 = vmatprep.subr.mxu0 0.0
    %455 = vmatpush1.msra.mxu0 0.0
    %456 = vmatprep.subr.mxu0 0.0
    %457 = vmatpush1.msra.mxu0 0.0
    %458 = vmatprep.subr.mxu0 0.0
    %459 = vmatpush1.msra.mxu0 0.0
    %460 = vmatprep.subr.mxu0 0.0
    %461 = vmatpush1.msra.mxu0 0.0
    %462 = vmatprep.subr.mxu0 0.0
    %463 = vmatpush1.msra.mxu0 0.0
    %464 = vmatprep.subr.mxu0 0.0
    %465 = vmatpush1.msra.mxu0 0.0
    %466 = vmatprep.subr.mxu0 0.0
    %467 = vmatpush1.msra.mxu0 0.0
    %468 = vmatprep.subr.mxu0 0.0
    %469 = vmatpush1.msra.mxu0 0.0
    %v470 = vand.u32 %v44, 4294901760
    %471 = vmatprep.subr.mxu0 %v470
    %v472 = vand.u32 %v43, 4294901760
    %473 = vmatpush1.msra.mxu0 %v472
    %474 = vmatprep.subr.mxu0 0.0
    %475 = vmatpush2.msra.mxu0 0.0
    %476 = vmatprep.subr.mxu0 0.0
    %477 = vmatpush2.msra.mxu0 0.0
    %478 = vmatprep.subr.mxu0 0.0
    %479 = vmatpush2.msra.mxu0 0.0
    %480 = vmatprep.subr.mxu0 0.0
    %481 = vmatpush2.msra.mxu0 0.0
    %482 = vmatprep.subr.mxu0 0.0
    %483 = vmatpush2.msra.mxu0 0.0
    %484 = vmatprep.subr.mxu0 0.0
    %485 = vmatpush2.msra.mxu0 0.0
    %486 = vmatprep.subr.mxu0 0.0
    %487 = vmatpush2.msra.mxu0 0.0
    %488 = vmatprep.subr.mxu0 0.0
    %489 = vmatpush2.msra.mxu0 0.0
    %490 = vmatprep.subr.mxu0 0.0
    %491 = vmatpush2.msra.mxu0 0.0
    %492 = vmatprep.subr.mxu0 0.0
    %493 = vmatpush2.msra.mxu0 0.0
    %494 = vmatprep.subr.mxu0 0.0
    %495 = vmatpush2.msra.mxu0 0.0
    %496 = vmatprep.subr.mxu0 0.0
    %497 = vmatpush2.msra.mxu0 0.0
    %498 = vmatprep.subr.mxu0 0.0
    %499 = vmatpush2.msra.mxu0 0.0
    %500 = vmatprep.subr.mxu0 0.0
    %501 = vmatpush2.msra.mxu0 0.0
    %502 = vmatprep.subr.mxu0 0.0
    %503 = vmatpush2.msra.mxu0 0.0
    %504 = vmatprep.subr.mxu0 0.0
    %505 = vmatpush2.msra.mxu0 0.0
    %506 = vmatprep.mubr.f32.mxu0 0.0
    %v507 = vand.u32 %v47, 4294901760
    %508 = vmatmul.mubr.f32.gmra.mxu0 %v507
    %v509 = vpop.f32.mrf.mxu0
    %v510 = vadd.f32 %v436, %v509
    %v511 = vpop.f32.mrf.mxu0
    %v512 = vadd.f32 %v438, %v511
    %513 = vdwg.mxu0
    %v514 = vld [vmem:[%s2] sm:$0x3]
    %v516 = vlaneseq
    %v517 = vshrl.u32 %v516, 7
    %v518 = vsub.s32 0, %v517
    %v519 = vrot.slane %v514, %v518
    %v520 = vlaneseq
    %v521 = vshrl.u32 %v520, 7
    %v522 = vsub.s32 1, %v521
    %v523 = vrot.slane %v514, %v522
    %v526 = vmul.f32 %v510, %v519
    %v527 = vmul.f32 %v512, %v523
    %v528 = vld [vmem:[%s3] sm:$0x3]
    %v530 = vlaneseq
    %v531 = vshrl.u32 %v530, 7
    %v532 = vsub.s32 0, %v531
    %v533 = vrot.slane %v528, %v532
    %v534 = vlaneseq
    %v535 = vshrl.u32 %v534, 7
    %v536 = vsub.s32 1, %v535
    %v537 = vrot.slane %v528, %v536
    %v540 = vadd.f32 %v526, %v533
    %v541 = vadd.f32 %v527, %v537
    %v542 = vand.u32 2147483647, %v540
    %vm543 = vcmp.le.f32.partialorder %v542, 0.7853982
    %vm544 = vcmp.lt.s32.totalorder %v540, 0
    %v545 = vand.u32 %v540, 2139095040
    %v546 = vshrl.u32 %v545, 23
    %v547 = vsub.s32 %v546, 127
    %v548 = vand.u32 2147483647, %v540
    %v549 = vand.u32 %v548, 8388607
    %v550 = vor.u32 %v549, 8388608
    %v551 = vsub.s32 0, %v550
    %v552 = vadd.s32 %v547, 1
    %vm553 = vcmp.gt.s32.totalorder %v552, 0
    %v554 = vsel %vm553, %v552, 0
    %v555 = vshrl.u32 %v554, 5
    %v556 = vand.u32 %v554, 31
    %v557 = vsub.s32 32, %v556
    %v558 = vshrl.u32 683565275, %v557
    %v559 = vshll.u32 683565275, %v556
    %v560 = vshrl.u32 2475754826, %v557
    %v561 = vor.u32 %v559, %v560
    %v562 = vshll.u32 2475754826, %v556
    %v563 = vshrl.u32 2131351028, %v557
    %v564 = vor.u32 %v562, %v563
    %v565 = vshll.u32 2131351028, %v556
    %v566 = vshrl.u32 2102212464, %v557
    %v567 = vor.u32 %v565, %v566
    %v568 = vshll.u32 2102212464, %v556
    %v569 = vshrl.u32 920167782, %v557
    %v570 = vor.u32 %v568, %v569
    %v571 = vshll.u32 920167782, %v556
    %v572 = vshrl.u32 1326507024, %v557
    %v573 = vor.u32 %v571, %v572
    %vm574 = vcmp.lt.s32.totalorder %v555, 1
    %vm575 = vcmp.lt.s32.totalorder %v555, 2
    %vm576 = vcmp.lt.s32.totalorder %v555, 3
    %vm577 = vcmp.lt.s32.totalorder %v555, 4
    %v578 = vsel %vm574, %v558, %v561
    %v579 = vsel %vm577, %v567, 2102212464
    %v580 = vsel %vm576, %v564, %v579
    %v581 = vsel %vm575, %v578, %v580
    %v582 = vsel %vm574, %v561, %v564
    %v583 = vsel %vm577, %v570, 920167782
    %v584 = vsel %vm576, %v567, %v583
    %v585 = vsel %vm575, %v582, %v584
    %v586 = vsel %vm574, %v564, %v567
    %v587 = vsel %vm577, %v573, 1326507024
    %v588 = vsel %vm576, %v570, %v587
    %v589 = vsel %vm575, %v586, %v588
    %v590 = vshll.u32 %v550, 8
    %v591 = vmul.u32.u64.compose %v590, %v589
    %v592 = vextract.low.u32 %v591
    %v593 = vextract.high.u32 %v591
    %v594 = vmul.u32.u64.compose %v590, %v585
    %v595 = vextract.low.u32 %v594
    %v596 = vextract.high.u32 %v594
    %v597 = vmul.u32 %v590, %v581
    %v598 = vadd.s32 %v593, %v595
    %vm599 = vc.u32 %v593, %v595
    %v600 = vadd.s32 %v596, 1
    %v601 = vsel %vm599, %v600, %v596
    %v602 = vadd.s32 %v597, %v601
    %v603 = vadd.s32 %v602, 536870912
    %v604 = vshrl.u32 %v603, 30
    %v605 = vshll.u32 %v604, 30
    %v606 = vsub.s32 %v602, %v605
    %vm607 = vcmp.lt.s32.totalorder %v606, 0
    %v608 = vsub.s32 0, %v606
    %v609 = vsel %vm607, %v608, %v606
    %v610 = vclz %v609
    %v611 = vsub.s32 %v610, 2
    %vm612 = vcmp.gt.s32.totalorder 0, %v611
    %v613 = vsel %vm612, 0, %v611
    %v614 = vsub.s32 32, %v613
    %v615 = vshll.u32 %v606, %v613
    %v616 = vshrl.u32 %v598, %v614
    %v617 = vor.u32 %v615, %v616
    %v618 = vsub.s32 4294967266, %v613
    %v619 = vadd.s32 %v618, 127
    %v620 = vshll.u32 %v619, 23
    %v621 = vor.u32 4788187, %v620
    %v622 = vand.u32 2147483647, %v621
    %v624 = vcvt.s32.f32 %v617
    %v625 = vmul.f32 %v624, %v622
    %v626 = vxor.u32 %v625, 2147483648
    %v627 = vsel %vm544, %v626, %v625
    %v628 = vsub.s32 4, %v604
    %v629 = vsel %vm544, %v628, %v604
    %v630 = vsel %vm543, %v540, %v627
    %v631 = vsel %vm543, 0, %v629
    %v632 = vcosq.f32.pop %v630
    %v633 = vsinq.f32.pop %v630
    %vm634 = vweird.f32 %v540
    %v635 = vadd.s32 %v631, 3
    %v636 = vand.u32 %v635, 3
    %vm637 = vcmp.lt.s32.totalorder %v636, 2
    %vm638 = vcmp.eq.s32.totalorder %v636, 0
    %v639 = vxor.u32 %v633, 2147483648
    %v640 = vsel %vm638, %v632, %v639
    %vm641 = vcmp.eq.s32.totalorder %v636, 2
    %v642 = vxor.u32 %v632, 2147483648
    %v643 = vsel %vm641, %v642, %v633
    %v644 = vsel %vm637, %v640, %v643
    %v645 = vsel %vm634, nan, %v644
    %v646 = vand.u32 2147483647, %v541
    %vm647 = vcmp.le.f32.partialorder %v646, 0.7853982
    %vm648 = vcmp.lt.s32.totalorder %v541, 0
    %v649 = vand.u32 %v541, 2139095040
    %v650 = vshrl.u32 %v649, 23
    %v651 = vsub.s32 %v650, 127
    %v652 = vand.u32 2147483647, %v541
    %v653 = vand.u32 %v652, 8388607
    %v654 = vor.u32 %v653, 8388608
    %v655 = vsub.s32 0, %v654
    %v656 = vadd.s32 %v651, 1
    %vm657 = vcmp.gt.s32.totalorder %v656, 0
    %v658 = vsel %vm657, %v656, 0
    %v659 = vshrl.u32 %v658, 5
    %v660 = vand.u32 %v658, 31
    %v661 = vsub.s32 32, %v660
    %v662 = vshrl.u32 683565275, %v661
    %v663 = vshll.u32 683565275, %v660
    %v664 = vshrl.u32 2475754826, %v661
    %v665 = vor.u32 %v663, %v664
    %v666 = vshll.u32 2475754826, %v660
    %v667 = vshrl.u32 2131351028, %v661
    %v668 = vor.u32 %v666, %v667
    %v669 = vshll.u32 2131351028, %v660
    %v670 = vshrl.u32 2102212464, %v661
    %v671 = vor.u32 %v669, %v670
    %v672 = vshll.u32 2102212464, %v660
    %v673 = vshrl.u32 920167782, %v661
    %v674 = vor.u32 %v672, %v673
    %v675 = vshll.u32 920167782, %v660
    %v676 = vshrl.u32 1326507024, %v661
    %v677 = vor.u32 %v675, %v676
    %vm678 = vcmp.lt.s32.totalorder %v659, 1
    %vm679 = vcmp.lt.s32.totalorder %v659, 2
    %vm680 = vcmp.lt.s32.totalorder %v659, 3
    %vm681 = vcmp.lt.s32.totalorder %v659, 4
    %v682 = vsel %vm678, %v662, %v665
    %v683 = vsel %vm681, %v671, 2102212464
    %v684 = vsel %vm680, %v668, %v683
    %v685 = vsel %vm679, %v682, %v684
    %v686 = vsel %vm678, %v665, %v668
    %v687 = vsel %vm681, %v674, 920167782
    %v688 = vsel %vm680, %v671, %v687
    %v689 = vsel %vm679, %v686, %v688
    %v690 = vsel %vm678, %v668, %v671
    %v691 = vsel %vm681, %v677, 1326507024
    %v692 = vsel %vm680, %v674, %v691
    %v693 = vsel %vm679, %v690, %v692
    %v694 = vshll.u32 %v654, 8
    %v695 = vmul.u32.u64.compose %v694, %v693
    %v696 = vextract.low.u32 %v695
    %v697 = vextract.high.u32 %v695
    %v698 = vmul.u32.u64.compose %v694, %v689
    %v699 = vextract.low.u32 %v698
    %v700 = vextract.high.u32 %v698
    %v701 = vmul.u32 %v694, %v685
    %v702 = vadd.s32 %v697, %v699
    %vm703 = vc.u32 %v697, %v699
    %v704 = vadd.s32 %v700, 1
    %v705 = vsel %vm703, %v704, %v700
    %v706 = vadd.s32 %v701, %v705
    %v707 = vadd.s32 %v706, 536870912
    %v708 = vshrl.u32 %v707, 30
    %v709 = vshll.u32 %v708, 30
    %v710 = vsub.s32 %v706, %v709
    %vm711 = vcmp.lt.s32.totalorder %v710, 0
    %v712 = vsub.s32 0, %v710
    %v713 = vsel %vm711, %v712, %v710
    %v714 = vclz %v713
    %v715 = vsub.s32 %v714, 2
    %vm716 = vcmp.gt.s32.totalorder 0, %v715
    %v717 = vsel %vm716, 0, %v715
    %v718 = vsub.s32 32, %v717
    %v719 = vshll.u32 %v710, %v717
    %v720 = vshrl.u32 %v702, %v718
    %v721 = vor.u32 %v719, %v720
    %v722 = vsub.s32 4294967266, %v717
    %v723 = vadd.s32 %v722, 127
    %v724 = vshll.u32 %v723, 23
    %v725 = vor.u32 4788187, %v724
    %v726 = vand.u32 2147483647, %v725
    %v728 = vcvt.s32.f32 %v721
    %v729 = vmul.f32 %v728, %v726
    %v730 = vxor.u32 %v729, 2147483648
    %v731 = vsel %vm648, %v730, %v729
    %v732 = vsub.s32 4, %v708
    %v733 = vsel %vm648, %v732, %v708
    %v734 = vsel %vm647, %v541, %v731
    %v735 = vsel %vm647, 0, %v733
    %v736 = vcosq.f32.pop %v734
    %v737 = vsinq.f32.pop %v734
    %vm738 = vweird.f32 %v541
    %v739 = vadd.s32 %v735, 3
    %v740 = vand.u32 %v739, 3
    %vm741 = vcmp.lt.s32.totalorder %v740, 2
    %vm742 = vcmp.eq.s32.totalorder %v740, 0
    %v743 = vxor.u32 %v737, 2147483648
    %v744 = vsel %vm742, %v736, %v743
    %vm745 = vcmp.eq.s32.totalorder %v740, 2
    %v746 = vxor.u32 %v736, 2147483648
    %v747 = vsel %vm745, %v746, %v737
    %v748 = vsel %vm741, %v744, %v747
    %v749 = vsel %vm738, nan, %v748
    %v752 = vcombine.low %v645, %v749
    %v754 = vunpack.c.l.s4 1983009808
    %v755 = vunpack.c.0.s8 %v754
    %v756 = vlaneseq
    %v757 = vshrl.u32 %v756, 7
    %v758 = vsub.s32 %v755, %v757
    %v759 = vrot.slane %v752, %v758
    %761 = vst [vmem:[#allocation7] sm:$0xf] %v759
    // Predicated region
    $region26: #{tpu_custom_call.1} parent=1 // pred_check
      _
    $region27: #{tpu_custom_call.1} parent=1 // pred_check_branch
      %763 = sbr.rel (0) target = $region29
    $region28: #{tpu_custom_call.1} parent=1 // pred_region
      %s765 = ssub.s32 64, 64
      %766 = vsyncadd [#allocation4], %s765
      %s768 = sshll.u32 [#allocation7], 4
      %s769 = int_to_ptr.vmem [resolvable:$true] %s768
      %771 = dma.vmem_to_hbm [thread:$0]  %s769, 64, %s4, [#allocation4]
    $region29: #{tpu_custom_call.1} parent=1 // pred_fallthru
      _
    // Predicated region
    $region30: #{tpu_custom_call.1} parent=1 // pred_check
      _
    $region31: #{tpu_custom_call.1} parent=1 // pred_check_branch
      %773 = sbr.rel (0) target = $region33
    $region32: #{tpu_custom_call.1} parent=1 // pred_region
      %774 = dma.done [#allocation4], 64
    $region33: #{tpu_custom_call.1} parent=1 // pred_fallthru
      _
    %775 = vsyncpa [#allocation3], 1
    %776 = vsyncpa [#allocation6], 1
    %777 = vsyncpa [#allocation4], 1

</llo_original>
